<compile_context>
chip_gen: v7x
topology: tpu7x:2x2x1
jax: 0.10.0
libtpu: 0.0.40
codegen_flags: <defaults>
</compile_context>

<pallas_src>
import jax
import jax.numpy as jnp
from jax.experimental import pallas as pl
from jax.experimental.pallas import tpu as pltpu

_LANE = 128
_TARGET_BLOCK_BYTES = 8 * 1024 * 1024   # ~8 MiB blocks (amortizes 0.35 us/step)
_SINGLE_BLOCK_BYTES = 1 * 1024 * 1024   # below this: one whole-array block
_VMEM_LIMIT_BYTES = 48 * 1024 * 1024    # 4 x 8 MiB buffers + headroom (< 64 MiB)


def _swish_kernel(x_ref, o_ref):
    # Compute in f32 for accuracy; swish(x) = x * sigmoid(x) = x / (1 + exp(-x)).
    xf = x_ref[...].astype(jnp.float32)
    o_ref[...] = (xf / (1.0 + jnp.exp(-xf))).astype(o_ref.dtype)


def _sublane_multiple(itemsize: int) -> int:
    # Packed sublane multiple: 8 (4-byte), 16 (2-byte), 32 (1-byte) dtypes.
    return max(8, 32 // max(1, itemsize))


def _num_blocks(total_bytes: int) -> int:
    # >= 4 blocks (2 per TC on v7x) and an even count for core balance.
    n = max(4, pl.cdiv(total_bytes, _TARGET_BLOCK_BYTES))
    return n + (n % 2)


def swish(x):
    """Elementwise swish (SiLU): x * sigmoid(x). Any shape / float dtype."""
    orig_shape = x.shape
    dtype = x.dtype
    n = x.size
    if n == 0:
        return x

    itemsize = jnp.dtype(dtype).itemsize
    sub = _sublane_multiple(itemsize)
    total_bytes = n * itemsize
    x_flat = jnp.ravel(x)  # free reshape (contiguous), no HBM copy

    compiler_params = pltpu.CompilerParams(
        dimension_semantics=("parallel",),
        vmem_limit_bytes=_VMEM_LIMIT_BYTES,
    )

    if n % _LANE == 0:
        # Lane-dense (rows, 128) slab -> unmasked vst on every full block.
        rows = n // _LANE
        x2d = x_flat.reshape(rows, _LANE)
        if total_bytes <= _SINGLE_BLOCK_BYTES:
            block_rows = rows
        else:
            nb = _num_blocks(total_bytes)
            block_rows = ((pl.cdiv(rows, nb) + sub - 1) // sub) * sub
            block_rows = min(block_rows, rows)
        grid = (pl.cdiv(rows, block_rows),)

        out2d = pl.pallas_call(
            _swish_kernel,
            out_shape=jax.ShapeDtypeStruct((rows, _LANE), dtype),
            grid_spec=pltpu.PrefetchScalarGridSpec(
                num_scalar_prefetch=0,
                grid=grid,
                in_specs=[pl.BlockSpec((block_rows, _LANE), lambda i: (i, 0))],
                out_specs=pl.BlockSpec((block_rows, _LANE), lambda i: (i, 0)),
            ),
            compiler_params=compiler_params,
        )(x2d)
        return out2d.reshape(orig_shape)

    # n not a multiple of 128: run directly on the flat 1-D array.  No pad and
    # no trailing slice (each was a full extra HBM pass); Pallas masks the
    # ragged final block's writeback.
    if total_bytes <= _SINGLE_BLOCK_BYTES:
        block_n = n  # whole array in one block, grid = 1
    else:
        nb = _num_blocks(total_bytes)
        quantum = sub * _LANE  # keep blocks lane- and sublane-aligned
        block_n = ((pl.cdiv(n, nb) + quantum - 1) // quantum) * quantum
    grid = (pl.cdiv(n, block_n),)

    out_flat = pl.pallas_call(
        _swish_kernel,
        out_shape=jax.ShapeDtypeStruct((n,), dtype),
        grid_spec=pltpu.PrefetchScalarGridSpec(
            num_scalar_prefetch=0,
            grid=grid,
            in_specs=[pl.BlockSpec((block_n,), lambda i: (i,))],
            out_specs=pl.BlockSpec((block_n,), lambda i: (i,)),
        ),
        compiler_params=compiler_params,
    )(x_flat)
    return out_flat.reshape(orig_shape)


if __name__ == "__main__":
    key = jax.random.PRNGKey(0)

    # NCHW input, same convention as the PyTorch module (2, 4, 16, 16).
    x = jax.random.normal(key, (2, 4, 16, 16), dtype=jnp.float32)
    out = swish(x)
    jax.block_until_ready(out)
    ref = x * jax.nn.sigmoid(x)
    assert out.shape == x.shape and out.dtype == x.dtype
    assert jnp.max(jnp.abs(out - ref)) < 1e-5

    # Non-multiple-of-128 size -> 1-D path, single whole-array block.
    y = jax.random.normal(jax.random.PRNGKey(1), (3, 5, 7), dtype=jnp.float32)
    out_y = swish(y)
    jax.block_until_ready(out_y)
    ref_y = y * jax.nn.sigmoid(y)
    assert out_y.shape == y.shape
    assert jnp.max(jnp.abs(out_y - ref_y)) < 1e-5

    # Medium aligned size -> multi-block (even grid, >=2 blocks per core) 2-D path.
    z = jax.random.normal(jax.random.PRNGKey(2), (8, 4, 128, 128), dtype=jnp.float32)
    out_z = swish(z)
    jax.block_until_ready(out_z)
    ref_z = z * jax.nn.sigmoid(z)
    assert jnp.max(jnp.abs(out_z - ref_z)) < 1e-5

    # Medium ragged size -> multi-block 1-D path with a masked final block.
    w = jax.random.normal(jax.random.PRNGKey(3), (262149,), dtype=jnp.float32)
    out_w = swish(w)
    jax.block_until_ready(out_w)
    ref_w = w * jax.nn.sigmoid(w)
    assert jnp.max(jnp.abs(out_w - ref_w)) < 1e-5

    # bf16 input exercises the dtype-dependent sublane alignment / f32 upcast.
    v = jax.random.normal(jax.random.PRNGKey(4), (4, 64, 128), dtype=jnp.bfloat16)
    out_v = swish(v)
    jax.block_until_ready(out_v)
    vf = v.astype(jnp.float32)
    ref_v = (vf * jax.nn.sigmoid(vf)).astype(jnp.bfloat16)
    assert out_v.dtype == jnp.bfloat16
    assert jnp.max(jnp.abs(out_v.astype(jnp.float32) - ref_v.astype(jnp.float32))) < 2e-2

    print("KERNEL_OK")
</pallas_src>

<mosaic_0001>
module attributes {stable_mosaic.version = 11 : i64} {
  func.func @_swish_kernel(%arg0: i32, %arg1: memref<16x128xf32, #tpu.memory_space<vmem>>, %arg2: memref<16x128xf32, #tpu.memory_space<vmem>>) attributes {dimension_semantics = [#tpu.dimension_semantics<parallel>], iteration_bounds = array<i64: 1>, scalar_prefetch = 0 : i64, scratch_operands = 0 : i64, tpu.core_type = #tpu.core_type<tc>, window_params = [{transform_indices = @transform_0, window_bounds = array<i64: 16, 128>}, {transform_indices = @transform_1, window_bounds = array<i64: 16, 128>}]} {
    %c0 = arith.constant 0 : index
    %c0_0 = arith.constant 0 : index
    %0 = vector.load %arg1[%c0, %c0_0] : memref<16x128xf32, #tpu.memory_space<vmem>>, vector<16x128xf32>
    %cst = arith.constant 0.000000e+00 : f32
    %1 = vector.broadcast %cst : f32 to vector<16x128xf32>
    %2 = arith.subf %1, %0 : vector<16x128xf32>
    %3 = math.exp %2 : vector<16x128xf32>
    %cst_1 = arith.constant 1.000000e+00 : f32
    %4 = vector.broadcast %cst_1 : f32 to vector<16x128xf32>
    %5 = arith.addf %4, %3 : vector<16x128xf32>
    %6 = arith.divf %0, %5 : vector<16x128xf32>
    %c0_2 = arith.constant 0 : index
    %c0_3 = arith.constant 0 : index
    %7 = vector.load %arg2[%c0_2, %c0_3] : memref<16x128xf32, #tpu.memory_space<vmem>>, vector<16x128xf32>
    tpu.vector_store %arg2[%c0_2, %c0_3], %6 {strides = array<i32>} : memref<16x128xf32, #tpu.memory_space<vmem>>, vector<16x128xf32>,
    return
  }
  func.func @transform_0(%arg0: i32) -> (i32, i32) {
    %c0_i32 = arith.constant 0 : i32
    %c0_i32_0 = arith.constant 0 : i32
    return %arg0, %c0_i32 : i32, i32
  }
  func.func @transform_1(%arg0: i32) -> (i32, i32) {
    %c0_i32 = arith.constant 0 : i32
    %c0_i32_0 = arith.constant 0 : i32
    return %arg0, %c0_i32 : i32, i32
  }
}

</mosaic_0001>

<llo_original>
// kernel: tpu_custom_call.1
$region0: #{tpu_custom_call.1}
  #allocation0 [shape = 'u32[]', space=smem, size = 0x4, offset = 0x4, fixed_abs, tag = 'smem constant byte address 0x4 - core index']
  #allocation1 [shape = 'u32[144,128]{1,0:T(1,128)}', space=vmem, size = 0x12000, scoped, tag = 'internal scratch']
  %s0 = inlined_call_operand.hbm [shape: f32[16,128], index: 0, kind: input, shape index: {}]
  %s1 = inlined_call_operand.hbm [shape: f32[16,128], index: 1, kind: output, shape index: {}]
  %s2 = sld [smem:[#allocation0]]
  $region18: #{tpu_custom_call.1} parent=0
    _
  %s4 = ssub.s32 1, %s2
  %s5 = scalar_select 0, %s4, %s2
  $region1: #{tpu_custom_call.1} parent=0
    #allocation2 [shape = 'u8[8192]{0}', space=vmem, size = 0x2000, scoped, tag = 'input window, operand 0, single buffered']
    #allocation3 [shape = 's32[1]{0}', space=sflag, size = 0x4, scoped, tag = 'scoped memory for tpu_custom_call.1']
    #allocation4 [shape = 's32[1]{0}', space=sflag, size = 0x4, scoped, tag = 'scoped memory for tpu_custom_call.1']
    #allocation5 [shape = 'u8[8192]{0}', space=vmem, size = 0x2000, scoped, tag = 'output window, operand 0, single buffered']
    %6 = vsyncpa [#allocation3], 0
    %7 = vsyncpa [#allocation4], 0
    // Predicated region
    $region2: #{tpu_custom_call.1} parent=1 // pred_check
      _
    $region3: #{tpu_custom_call.1} parent=1 // pred_check_branch
      %9 = sbr.rel (0) target = $region5
    $region4: #{tpu_custom_call.1} parent=1 // pred_region
      %s11 = ssub.s32 256, 256
      %12 = vsyncadd [#allocation3], %s11
      %s13 = sshll.u32 [#allocation2], 4
      %s14 = int_to_ptr.vmem [resolvable:$true] %s13
      %19 = dma.hbm_to_vmem [thread:$0]  %s0, 256, %s14, [#allocation3], 128, 128, 8
    $region5: #{tpu_custom_call.1} parent=1 // pred_fallthru
      _
    // Predicated region
    $region6: #{tpu_custom_call.1} parent=1 // pred_check
      _
    $region7: #{tpu_custom_call.1} parent=1 // pred_check_branch
      %21 = sbr.rel (0) target = $region9
    $region8: #{tpu_custom_call.1} parent=1 // pred_region
      %22 = dma.done [#allocation3], 256
    $region9: #{tpu_custom_call.1} parent=1 // pred_fallthru
      _
    %v23 = vld [vmem:[#allocation2] sm:$0xff]
    %v24 = vld [vmem:[#allocation2 + $0x8] sm:$0xff]
    %v25 = vsub.f32 0.0, %v23
    %v26 = vsub.f32 0.0, %v24
    %v27 = vmul.f32 %v25, 1.442695
    %v28 = vpow.pop %v27
    %v29 = vmul.f32 %v26, 1.442695
    %v30 = vpow.pop %v29
    %v31 = vadd.f32 %v28, 1.0
    %v32 = vadd.f32 %v30, 1.0
    %v33 = vrcp.pop %v31
    %v34 = vmul.f32 %v23, %v33
    %v35 = vrcp.pop %v32
    %v36 = vmul.f32 %v24, %v35
    %37 = vst [vmem:[#allocation5] sm:$0xff] %v34
    %38 = vst [vmem:[#allocation5 + $0x8] sm:$0xff] %v36
    // Predicated region
    $region10: #{tpu_custom_call.1} parent=1 // pred_check
      _
    $region11: #{tpu_custom_call.1} parent=1 // pred_check_branch
      %40 = sbr.rel (0) target = $region13
    $region12: #{tpu_custom_call.1} parent=1 // pred_region
      %s42 = ssub.s32 256, 256
      %43 = vsyncadd [#allocation4], %s42
      %s44 = sshll.u32 [#allocation5], 4
      %s45 = int_to_ptr.vmem [resolvable:$true] %s44
      %50 = dma.vmem_to_hbm [thread:$0]  %s45, 256, %s1, [#allocation4], 128, 128, 8
    $region13: #{tpu_custom_call.1} parent=1 // pred_fallthru
      _
    // Predicated region
    $region14: #{tpu_custom_call.1} parent=1 // pred_check
      _
    $region15: #{tpu_custom_call.1} parent=1 // pred_check_branch
      %52 = sbr.rel (0) target = $region17
    $region16: #{tpu_custom_call.1} parent=1 // pred_region
      %53 = dma.done [#allocation4], 256
    $region17: #{tpu_custom_call.1} parent=1 // pred_fallthru
      _
    %54 = vsyncpa [#allocation3], 1
    %55 = vsyncpa [#allocation4], 1

</llo_original>
